<compile_context>
chip_gen: v6e
topology: v6e:2x2x1
jax: 0.10.0
libtpu: 0.0.40
codegen_flags: <defaults>
</compile_context>

<pallas_src>
import math

import jax
import jax.numpy as jnp
from jax.experimental import pallas as pl
from jax.experimental.pallas import tpu as pltpu


def _pe_kernel(pos_ref, const_ref, out_ref):
    # pos_ref:   (TR, 1) f32  -- positions for this row tile
    # const_ref: (2, D)  f32  -- row 0: div_full[j] = div_term[j // 2]
    #                            row 1: phase[j]    = 0 (even j) | pi/2 (odd j)
    # out_ref:   (TR, D) f32
    pos = pos_ref[...]                       # (TR, 1)
    c = const_ref[...]                       # (2, D)
    div = c[0:1, :]                          # (1, D)
    phase = c[1:2, :]                        # (1, D)
    # cos(x) == sin(x + pi/2): one EUP transcendental per element, no
    # iota / mod / compare / select work on the VPU.
    out_ref[...] = jnp.sin(pos * div + phase)


def positional_encoder(position, d_model: int, max_len: int = 1000, row_tile=None):
    """position: [B, L] (any real/int dtype). Returns pe: [B, L, d_model] float32."""
    assert d_model % 2 == 0, "d_model must be even (same constraint as the torch module)"
    B, L = position.shape
    rows = B * L

    # Lane-pad the feature dim to a multiple of 128 for unmasked vector stores.
    d_pad = 128 * pl.cdiv(d_model, 128)

    # Deterministic "buffer" init, exactly as in __init__, plus the phase row
    # used by the sin-only rewrite.
    div_term = jnp.exp(
        jnp.arange(0, d_model, 2, dtype=jnp.float32) * (-math.log(10000.0) / d_model)
    )                                                          # (d_model//2,)
    div_full = jnp.repeat(div_term, 2)                         # (d_model,)
    phase_full = jnp.tile(jnp.array([0.0, math.pi / 2], jnp.float32), d_model // 2)
    if d_pad != d_model:
        pad = d_pad - d_model
        div_full = jnp.pad(div_full, (0, pad))
        phase_full = jnp.pad(phase_full, (0, pad))
    consts = jnp.stack([div_full, phase_full], axis=0)         # (2, d_pad)

    # Row-tile sizing: the kernel is HBM-write bound -> use large tiles to
    # amortize per-grid-step overhead, but keep the double-buffered output
    # (2 * row_tile * d_pad * 4 B) well inside scoped VMEM on all generations.
    if row_tile is None:
        per_buf_budget = 6 * 1024 * 1024                       # bytes / output buffer
        rt = per_buf_budget // (d_pad * 4)
        rt = max(8, min(int(rt), 2048))
        rt = (rt // 8) * 8
        rows8 = 8 * pl.cdiv(rows, 8)
        if rows8 >= 16:
            # Keep at least 2 grid steps so the "parallel" axis can shard
            # across both TensorCores on v7x.
            rt = min(rt, max(8, ((rows8 // 2) // 8) * 8))
        else:
            rt = min(rt, rows8)
        row_tile = rt
    assert row_tile % 8 == 0

    rows_pad = row_tile * pl.cdiv(rows, row_tile)
    pos2d = position.reshape(rows, 1).astype(jnp.float32)
    if rows_pad != rows:
        pos2d = jnp.pad(pos2d, ((0, rows_pad - rows), (0, 0)))

    out = pl.pallas_call(
        _pe_kernel,
        out_shape=jax.ShapeDtypeStruct((rows_pad, d_pad), jnp.float32),
        grid=(rows_pad // row_tile,),
        in_specs=[
            pl.BlockSpec((row_tile, 1), lambda i: (i, 0)),
            pl.BlockSpec((2, d_pad), lambda i: (0, 0)),        # resident constant
        ],
        out_specs=pl.BlockSpec((row_tile, d_pad), lambda i: (i, 0)),
        compiler_params=pltpu.CompilerParams(
            dimension_semantics=("parallel",),
            vmem_limit_bytes=32 * 1024 * 1024,
        ),
    )(pos2d, consts)

    return out[:rows, :d_model].reshape(B, L, d_model)


def _reference(position, d_model):
    """Pure-JAX mirror of the PyTorch forward for validation."""
    div_term = jnp.exp(
        jnp.arange(0, d_model, 2, dtype=jnp.float32) * (-math.log(10000.0) / d_model)
    )
    pos = position.astype(jnp.float32)[..., None]              # (B, L, 1)
    s = jnp.sin(pos * div_term)                                # (B, L, d/2)
    c = jnp.cos(pos * div_term)                                # (B, L, d/2)
    pe = jnp.zeros((*position.shape, d_model), jnp.float32)
    pe = pe.at[..., 0::2].set(s)
    pe = pe.at[..., 1::2].set(c)
    return pe


if __name__ == "__main__":
    B, L, d_model = 2, 8, 32
    key = jax.random.PRNGKey(0)
    # positions (e.g. integer timesteps) as floats, up to max_len
    position = jax.random.randint(key, (B, L), 0, 1000).astype(jnp.float32)

    pe = positional_encoder(position, d_model)
    pe = jax.block_until_ready(pe)

    ref = _reference(position, d_model)
    assert pe.shape == (B, L, d_model)
    assert pe.dtype == jnp.float32
    # cos(x) is computed as sin(x + pi/2); for angles up to ~max_len the f32
    # rounding of the argument bounds the deviation at a few 1e-5, so compare
    # with a correspondingly relaxed (still tight for f32 trig at |x|~1e3)
    # tolerance.
    assert jnp.allclose(pe, ref, atol=2e-4, rtol=1e-5), "mismatch vs reference"

    print("KERNEL_OK")
</pallas_src>

<mosaic_0001>
module attributes {stable_mosaic.version = 11 : i64} {
  func.func @_pe_kernel(%arg0: i32, %arg1: memref<8x1xf32, #tpu.memory_space<vmem>>, %arg2: memref<2x128xf32, #tpu.memory_space<vmem>>, %arg3: memref<8x128xf32, #tpu.memory_space<vmem>>) attributes {dimension_semantics = [#tpu.dimension_semantics<parallel>], iteration_bounds = array<i64: 2>, scalar_prefetch = 0 : i64, scratch_operands = 0 : i64, tpu.core_type = #tpu.core_type<tc>, window_params = [{transform_indices = @transform_0, window_bounds = array<i64: 8, 1>}, {pipeline_mode = #tpu.pipeline_mode<synchronous>, transform_indices = @transform_1, window_bounds = array<i64: 2, 128>}, {transform_indices = @transform_2, window_bounds = array<i64: 8, 128>}]} {
    %c0 = arith.constant 0 : index
    %c0_0 = arith.constant 0 : index
    %0 = vector.load %arg1[%c0, %c0_0] : memref<8x1xf32, #tpu.memory_space<vmem>>, vector<8x1xf32>
    %c0_1 = arith.constant 0 : index
    %c0_2 = arith.constant 0 : index
    %1 = vector.load %arg2[%c0_1, %c0_2] : memref<2x128xf32, #tpu.memory_space<vmem>>, vector<2x128xf32>
    %2 = vector.extract_strided_slice %1 {offsets = [0, 0], sizes = [1, 128], strides = [1, 1]} : vector<2x128xf32> to vector<1x128xf32>
    %3 = vector.extract_strided_slice %1 {offsets = [1, 0], sizes = [1, 128], strides = [1, 1]} : vector<2x128xf32> to vector<1x128xf32>
    %4 = vector.broadcast %0 : vector<8x1xf32> to vector<8x128xf32>
    %5 = vector.broadcast %2 : vector<1x128xf32> to vector<8x128xf32>
    %6 = arith.mulf %4, %5 : vector<8x128xf32>
    %7 = vector.broadcast %3 : vector<1x128xf32> to vector<8x128xf32>
    %8 = arith.addf %6, %7 : vector<8x128xf32>
    %9 = math.sin %8 : vector<8x128xf32>
    %c0_3 = arith.constant 0 : index
    %c0_4 = arith.constant 0 : index
    %10 = vector.load %arg3[%c0_3, %c0_4] : memref<8x128xf32, #tpu.memory_space<vmem>>, vector<8x128xf32>
    tpu.vector_store %arg3[%c0_3, %c0_4], %9 {strides = array<i32>} : memref<8x128xf32, #tpu.memory_space<vmem>>, vector<8x128xf32>,
    return
  }
  func.func @transform_0(%arg0: i32) -> (i32, i32) {
    %c0_i32 = arith.constant 0 : i32
    %c0_i32_0 = arith.constant 0 : i32
    return %arg0, %c0_i32 : i32, i32
  }
  func.func @transform_1(%arg0: i32) -> (i32, i32) {
    %c0_i32 = arith.constant 0 : i32
    %c0_i32_0 = arith.constant 0 : i32
    %c0_i32_1 = arith.constant 0 : i32
    return %c0_i32, %c0_i32_0 : i32, i32
  }
  func.func @transform_2(%arg0: i32) -> (i32, i32) {
    %c0_i32 = arith.constant 0 : i32
    %c0_i32_0 = arith.constant 0 : i32
    return %arg0, %c0_i32 : i32, i32
  }
}

</mosaic_0001>

<llo_original>
// kernel: tpu_custom_call.1
$region0: #{tpu_custom_call.1}
  #allocation0 [shape = 'u32[]', space=smem, size = 0x4, offset = 0x4, fixed_abs, tag = 'smem constant byte address 0x4 - core index']
  #allocation1 [shape = 'u32[144,128]{1,0:T(1,128)}', space=vmem, size = 0x12000, scoped, tag = 'internal scratch']
  %s0 = inlined_call_operand.vmem [shape: f32[16,1], index: 0, kind: input, shape index: {}]
  %s1 = inlined_call_operand.vmem [shape: f32[2,128], index: 1, kind: input, shape index: {}]
  %s2 = inlined_call_operand.hbm [shape: f32[16,128], index: 2, kind: output, shape index: {}]
  %s3 = sld [smem:[#allocation0]]
  $region41: #{tpu_custom_call.1} parent=0
    _
  %s5 = ssub.s32 1, %s3
  %s6 = scalar_select 0, %s5, %s3
  $region1: #{tpu_custom_call.1} parent=0
    #allocation2 [shape = 'u8[8192]{0}', space=vmem, size = 0x2000, scoped, tag = 'output window, operand 0']
    #allocation3 [shape = 's32[2]{0}', space=sflag, size = 0x8, scoped, tag = 'scoped memory for tpu_custom_call.1']
    %7 = vsyncpa [#allocation3], 0
    %s8 = scalar_lea.sflag [#allocation3], 1
    %9 = vsyncpa %s8, 0
    loop: start=0, step=1, limit=4
    $region2: #{tpu_custom_call.1} parent=1 // loop_pre_header
      _
    $region3: #{tpu_custom_call.1} parent=1 // loop_header
      %s11 = sphi 0, %s15
      %p12 = scmp.ge.s32.totalorder %s11, 4
      %s21 = sphi 0, %s23
      %s24 = sphi 0, %s21
      %s25 = sphi 0, %s24
      %s41 = sphi 0, %s25
      %s45 = sphi 0, %s45
      %s47 = sphi 0, %s45
      %s48 = sphi 0, %s47
      %s62 = sphi 0, %s48
      %s68 = sphi 0, %s70
      %s71 = sphi 0, %s68
      %s72 = sphi 0, %s71
      %s88 = sphi 0, %s72
    $region4: #{tpu_custom_call.1} parent=1 // loop_header_branch
      %14 = sbr.rel (%p12) target = $region8
    $region5: #{tpu_custom_call.1} parent=1 // loop_body
      %s16 = ssub.s32 %s11, 1
      %s17 = ssub.s32 %s11, 2
      %s18 = sadd.s32 %s11, 1
      %s19 = ssub.s32 %s11, %s18
      %p20 = scmp.eq.s32.totalorder %s19, 0
      %s22 = sadd.s32 %s21, 1
      %s23 = scalar_select %p20, %s21, %s22
      %p26 = pneg %p20
      %p27 = scmp.eq.s32.totalorder %s11, 1
      %p28 = por %p26, %p27
      %p29 = scmp.ne.s32.totalorder %s21, %s24
      %p30 = scmp.eq.s32.totalorder %s11, 0
      %p31 = por %p29, %p30
      %p32 = scmp.ne.s32.totalorder %s21, %s24
      %p33 = scmp.eq.s32.totalorder %s16, 1
      %p34 = por %p32, %p33
      %p35 = scmp.ne.s32.totalorder %s24, %s25
      %p36 = scmp.eq.s32.totalorder %s16, 0
      %p37 = por %p35, %p36
      %p38 = scmp.ne.s32.totalorder %s24, %s25
      %p39 = scmp.eq.s32.totalorder %s17, 1
      %p40 = por %p38, %p39
      %p42 = scmp.ne.s32.totalorder %s25, %s41
      %p43 = scmp.eq.s32.totalorder %s17, 0
      %p44 = por %p42, %p43
      %s46 = sadd.s32 %s45, 1
      %p49 = scmp.eq.s32.totalorder %s11, 1
      %p50 = scmp.ne.s32.totalorder %s45, %s47
      %p51 = scmp.eq.s32.totalorder %s11, 0
      %p52 = por %p50, %p51
      %p53 = scmp.ne.s32.totalorder %s45, %s47
      %p54 = scmp.eq.s32.totalorder %s16, 1
      %p55 = por %p53, %p54
      %p56 = scmp.ne.s32.totalorder %s47, %s48
      %p57 = scmp.eq.s32.totalorder %s16, 0
      %p58 = por %p56, %p57
      %p59 = scmp.ne.s32.totalorder %s47, %s48
      %p60 = scmp.eq.s32.totalorder %s17, 1
      %p61 = por %p59, %p60
      %p63 = scmp.ne.s32.totalorder %s48, %s62
      %p64 = scmp.eq.s32.totalorder %s17, 0
      %p65 = por %p63, %p64
      %s66 = ssub.s32 %s11, %s18
      %p67 = scmp.eq.s32.totalorder %s66, 0
      %s69 = sadd.s32 %s68, 1
      %s70 = scalar_select %p67, %s68, %s69
      %p73 = pneg %p67
      %p74 = scmp.eq.s32.totalorder %s11, 1
      %p75 = por %p73, %p74
      %p76 = scmp.ne.s32.totalorder %s68, %s71
      %p77 = scmp.eq.s32.totalorder %s11, 0
      %p78 = por %p76, %p77
      %p79 = scmp.ne.s32.totalorder %s68, %s71
      %p80 = scmp.eq.s32.totalorder %s16, 1
      %p81 = por %p79, %p80
      %p82 = scmp.ne.s32.totalorder %s71, %s72
      %p83 = scmp.eq.s32.totalorder %s16, 0
      %p84 = por %p82, %p83
      %p85 = scmp.ne.s32.totalorder %s71, %s72
      %p86 = scmp.eq.s32.totalorder %s17, 1
      %p87 = por %p85, %p86
      %p89 = scmp.ne.s32.totalorder %s72, %s88
      %p90 = scmp.eq.s32.totalorder %s17, 0
      %p91 = por %p89, %p90
      %p92 = scmp.le.s32.totalorder 1, %s11
      %p93 = scmp.lt.s32.totalorder %s11, 3
      %p94 = pnand %p92, %p93
      %p95 = pneg %p94
      // Predicated region
      $region9: #{tpu_custom_call.1} parent=5 // pred_check
        _
      $region10: #{tpu_custom_call.1} parent=5 // pred_check_branch
        %97 = sbr.rel (%p94) target = $region12
      $region11: #{tpu_custom_call.1} parent=5 // pred_region
        %s98 = ssub.s32 %s11, 1
        // Predicated region
        $region13: #{tpu_custom_call.1} parent=11 // pred_check
          %p99 = pneg %p58
        $region14: #{tpu_custom_call.1} parent=11 // pred_check_branch
          %101 = sbr.rel (%p99) target = $region16
        $region15: #{tpu_custom_call.1} parent=11 // pred_region
          _
        $region16: #{tpu_custom_call.1} parent=11 // pred_fallthru
          _
      $region12: #{tpu_custom_call.1} parent=5 // pred_fallthru
        _
      %p102 = scmp.lt.s32.totalorder %s11, 2
      // Predicated region
      $region17: #{tpu_custom_call.1} parent=5 // pred_check
        %p103 = pneg %p102
      $region18: #{tpu_custom_call.1} parent=5 // pred_check_branch
        %105 = sbr.rel (%p103) target = $region20
      $region19: #{tpu_custom_call.1} parent=5 // pred_region
        // Predicated region
        $region21: #{tpu_custom_call.1} parent=19 // pred_check
          %p106 = pneg %p31
        $region22: #{tpu_custom_call.1} parent=19 // pred_check_branch
          %108 = sbr.rel (%p106) target = $region24
        $region23: #{tpu_custom_call.1} parent=19 // pred_region
          %p109 = scmp.lt.s32.totalorder %s11, 1
          %s110 = scalar_select %p109, %s11, 1
          %s111 = smul.addr %s110, 8
          %s112 = scalar_lea.vmem %s0, %s111
        $region24: #{tpu_custom_call.1} parent=19 // pred_fallthru
          _
      $region20: #{tpu_custom_call.1} parent=5 // pred_fallthru
        _
      %p113 = scmp.le.s32.totalorder 1, %s11
      %p114 = scmp.lt.s32.totalorder %s11, 3
      %p115 = pnand %p113, %p114
      %p116 = pneg %p115
      // Predicated region
      $region25: #{tpu_custom_call.1} parent=5 // pred_check
        _
      $region26: #{tpu_custom_call.1} parent=5 // pred_check_branch
        %118 = sbr.rel (%p115) target = $region28
      $region27: #{tpu_custom_call.1} parent=5 // pred_region
        %s119 = ssub.s32 %s11, 1
        %p120 = scmp.lt.s32.totalorder %s16, 1
        %s121 = scalar_select %p120, %s16, 1
        %s122 = smul.addr %s121, 8
        %s123 = scalar_lea.vmem %s0, %s122
        %p124 = pneg %p37
        %p125 = pneg %p34
        %p126 = pneg %p58
        %p127 = pneg %p55
        %p128 = pneg %p84
        %p129 = pneg %p81
        %s130 = sand.u32 %s71, 1
        %s131 = scalar_lea.sflag [#allocation3], %s130
        %s132 = sand.u32 %s71, 1
        %s133 = smul.addr %s132, 8
        %s134 = scalar_lea.vmem [#allocation2], %s133
        %p135 = scmp.lt.s32.totalorder %s16, 1
        %s136 = scalar_select %p135, %s16, 1
        %s137 = smul.addr %s136, 8
        %s138 = scalar_lea.vmem %s0, %s137
        %v139 = vld [vmem:[%s138] sm:$0xff]
        %v140 = vld [vmem:[%s1] sm:$0x3]
        %142 = vset.pattern.permute.xlu0 0
        %143 = vperm.xlu0 %142, %v139
        %v144 = vpop.permute.xlu0 %143
        %v146 = vlaneseq
        %v147 = vshrl.u32 %v146, 7
        %v148 = vsub.s32 0, %v147
        %v149 = vrot.slane %v140, %v148
        %v150 = vmul.f32 %v144, %v149
        %v151 = vlaneseq
        %v152 = vshrl.u32 %v151, 7
        %v153 = vsub.s32 1, %v152
        %v154 = vrot.slane %v140, %v153
        %v155 = vadd.f32 %v150, %v154
        %v156 = vand.u32 2147483647, %v155
        %vm157 = vcmp.le.f32.partialorder %v156, 0.7853982
        %vm158 = vcmp.lt.s32.totalorder %v155, 0
        %v159 = vand.u32 %v155, 2139095040
        %v160 = vshrl.u32 %v159, 23
        %v161 = vsub.s32 %v160, 127
        %v162 = vand.u32 2147483647, %v155
        %v163 = vand.u32 %v162, 8388607
        %v164 = vor.u32 %v163, 8388608
        %v165 = vsub.s32 0, %v164
        %v166 = vadd.s32 %v161, 1
        %vm167 = vcmp.gt.s32.totalorder %v166, 0
        %v168 = vsel %vm167, %v166, 0
        %v169 = vshrl.u32 %v168, 5
        %v170 = vand.u32 %v168, 31
        %v171 = vsub.s32 32, %v170
        %v172 = vshrl.u32 683565275, %v171
        %v173 = vshll.u32 683565275, %v170
        %v174 = vshrl.u32 2475754826, %v171
        %v175 = vor.u32 %v173, %v174
        %v176 = vshll.u32 2475754826, %v170
        %v177 = vshrl.u32 2131351028, %v171
        %v178 = vor.u32 %v176, %v177
        %v179 = vshll.u32 2131351028, %v170
        %v180 = vshrl.u32 2102212464, %v171
        %v181 = vor.u32 %v179, %v180
        %v182 = vshll.u32 2102212464, %v170
        %v183 = vshrl.u32 920167782, %v171
        %v184 = vor.u32 %v182, %v183
        %v185 = vshll.u32 920167782, %v170
        %v186 = vshrl.u32 1326507024, %v171
        %v187 = vor.u32 %v185, %v186
        %vm188 = vcmp.lt.s32.totalorder %v169, 1
        %vm189 = vcmp.lt.s32.totalorder %v169, 2
        %vm190 = vcmp.lt.s32.totalorder %v169, 3
        %vm191 = vcmp.lt.s32.totalorder %v169, 4
        %v192 = vsel %vm188, %v172, %v175
        %v193 = vsel %vm191, %v181, 2102212464
        %v194 = vsel %vm190, %v178, %v193
        %v195 = vsel %vm189, %v192, %v194
        %v196 = vsel %vm188, %v175, %v178
        %v197 = vsel %vm191, %v184, 920167782
        %v198 = vsel %vm190, %v181, %v197
        %v199 = vsel %vm189, %v196, %v198
        %v200 = vsel %vm188, %v178, %v181
        %v201 = vsel %vm191, %v187, 1326507024
        %v202 = vsel %vm190, %v184, %v201
        %v203 = vsel %vm189, %v200, %v202
        %v204 = vshll.u32 %v164, 8
        %v205 = vmul.u32.u64.compose %v204, %v203
        %v206 = vextract.low.u32 %v205
        %v207 = vextract.high.u32 %v205
        %v208 = vmul.u32.u64.compose %v204, %v199
        %v209 = vextract.low.u32 %v208
        %v210 = vextract.high.u32 %v208
        %v211 = vmul.u32 %v204, %v195
        %v212 = vadd.s32 %v207, %v209
        %vm213 = vc.u32 %v207, %v209
        %v214 = vadd.s32 %v210, 1
        %v215 = vsel %vm213, %v214, %v210
        %v216 = vadd.s32 %v211, %v215
        %v217 = vadd.s32 %v216, 536870912
        %v218 = vshrl.u32 %v217, 30
        %v219 = vshll.u32 %v218, 30
        %v220 = vsub.s32 %v216, %v219
        %vm221 = vcmp.lt.s32.totalorder %v220, 0
        %v222 = vsub.s32 0, %v220
        %v223 = vsel %vm221, %v222, %v220
        %v224 = vclz %v223
        %v225 = vsub.s32 %v224, 2
        %vm226 = vcmp.gt.s32.totalorder 0, %v225
        %v227 = vsel %vm226, 0, %v225
        %v228 = vsub.s32 32, %v227
        %v229 = vshll.u32 %v220, %v227
        %v230 = vshrl.u32 %v212, %v228
        %v231 = vor.u32 %v229, %v230
        %v232 = vsub.s32 4294967266, %v227
        %v233 = vadd.s32 %v232, 127
        %v234 = vshll.u32 %v233, 23
        %v235 = vor.u32 4788187, %v234
        %v236 = vand.u32 2147483647, %v235
        %v238 = vcvt.s32.f32 %v231
        %v239 = vmul.f32 %v238, %v236
        %v240 = vxor.u32 %v239, 2147483648
        %v241 = vsel %vm158, %v240, %v239
        %v242 = vsub.s32 4, %v218
        %v243 = vsel %vm158, %v242, %v218
        %v244 = vsel %vm157, %v155, %v241
        %v245 = vsel %vm157, 0, %v243
        %v246 = vcosq.f32.pop %v244
        %v247 = vsinq.f32.pop %v244
        %vm248 = vweird.f32 %v155
        %v249 = vadd.s32 %v245, 3
        %v250 = vand.u32 %v249, 3
        %vm251 = vcmp.lt.s32.totalorder %v250, 2
        %vm252 = vcmp.eq.s32.totalorder %v250, 0
        %v253 = vxor.u32 %v247, 2147483648
        %v254 = vsel %vm252, %v246, %v253
        %vm255 = vcmp.eq.s32.totalorder %v250, 2
        %v256 = vxor.u32 %v246, 2147483648
        %v257 = vsel %vm255, %v256, %v247
        %v258 = vsel %vm251, %v254, %v257
        %v259 = vsel %vm248, nan, %v258
        %260 = vst [vmem:[%s134] sm:$0xff] %v259
        %s261 = sand.u32 %s71, 1
        %s262 = scalar_lea.sflag [#allocation3], %s261
        %s263 = sand.u32 %s71, 1
        %s264 = smul.addr %s263, 8
        %s265 = scalar_lea.vmem [#allocation2], %s264
        // Predicated region
        $region29: #{tpu_custom_call.1} parent=27 // pred_check
          %p266 = pneg %p81
        $region30: #{tpu_custom_call.1} parent=27 // pred_check_branch
          %268 = sbr.rel (%p266) target = $region32
        $region31: #{tpu_custom_call.1} parent=27 // pred_region
          %s270 = ssub.s32 128, 128
          %271 = vsyncadd %s262, %s270
          %s272 = smul.addr %s16, 128
          %s273 = scalar_lea.hbm %s2, %s272
          %s275 = sshll.u32 %s265, 4
          %s276 = int_to_ptr.vmem [resolvable:$true] %s275
          %278 = dma.vmem_to_hbm [thread:$0]  %s276, 128, %s273, %s262
        $region32: #{tpu_custom_call.1} parent=27 // pred_fallthru
          _
      $region28: #{tpu_custom_call.1} parent=5 // pred_fallthru
        _
      %p279 = scmp.le.s32.totalorder 2, %s11
      // Predicated region
      $region33: #{tpu_custom_call.1} parent=5 // pred_check
        %p280 = pneg %p279
      $region34: #{tpu_custom_call.1} parent=5 // pred_check_branch
        %282 = sbr.rel (%p280) target = $region36
      $region35: #{tpu_custom_call.1} parent=5 // pred_region
        %s283 = ssub.s32 %s11, 2
        // Predicated region
        $region37: #{tpu_custom_call.1} parent=35 // pred_check
          %p284 = pneg %p87
        $region38: #{tpu_custom_call.1} parent=35 // pred_check_branch
          %286 = sbr.rel (%p284) target = $region40
        $region39: #{tpu_custom_call.1} parent=35 // pred_region
          %s287 = sand.u32 %s72, 1
          %s288 = scalar_lea.sflag [#allocation3], %s287
          %s289 = sand.u32 %s72, 1
          %s290 = smul.addr %s289, 8
          %s291 = scalar_lea.vmem [#allocation2], %s290
          %292 = dma.done %s288, 128
        $region40: #{tpu_custom_call.1} parent=35 // pred_fallthru
          _
      $region36: #{tpu_custom_call.1} parent=5 // pred_fallthru
        _
    $region6: #{tpu_custom_call.1} parent=1 // loop_footer
      %s15 = sadd.s32 1, %s11
    $region7: #{tpu_custom_call.1} parent=1 // loop_footer_branch
      %10 = sbr.rel target = $region3
    $region8: #{tpu_custom_call.1} parent=1 // loop_exit
      _
    %293 = vsyncpa [#allocation3], 1
    %s294 = scalar_lea.sflag [#allocation3], 1
    %295 = vsyncpa %s294, 1

</llo_original>
